<compile_context>
chip_gen: v6e
topology: v6e:2x2x1
jax: 0.10.0
libtpu: 0.0.40
codegen_flags: <defaults>
</compile_context>

<pallas_src>
import functools

import jax
import jax.numpy as jnp
from jax.experimental import pallas as pl
from jax.experimental.pallas import tpu as pltpu


def _conv1x1_block_kernel(x_ref, w1_ref, b1_ref, w2_ref, b2_ref, o_ref, *,
                          compute_dtype):
    x = x_ref[...]                                   # (H, Lt), input dtype (f32)
    xc = x.astype(compute_dtype)

    # conv1 (1x1):  W1 @ X, contraction over the H input channels, f32 accum.
    h = jnp.dot(w1_ref[...], xc, preferred_element_type=jnp.float32) + b1_ref[...]
    h = jnp.maximum(h, 0.0)                          # ReLU
    # dropout1(0.2): identity in eval mode -> no-op.

    # conv2 (1x1):  W2 @ relu(...), bf16 MXU inputs, f32 accumulation.
    y = jnp.dot(w2_ref[...], h.astype(compute_dtype),
                preferred_element_type=jnp.float32) + b2_ref[...]
    # dropout2(0.2): identity in eval mode -> no-op.

    # Residual add in f32 on the full (H, Lt) tile; single lane-dense store
    # (last dim = length tile, multiple of 128 or the full L).
    o_ref[...] = (y + x.astype(jnp.float32)).astype(o_ref.dtype)


def conv_forward(x, w1, b1, w2, b2, *, length_tile=None,
                 compute_dtype=jnp.bfloat16, single_buffer_weights=False):
    """x: (B, H, L).  w1/w2: (H, H, 1) PyTorch Conv1d weights (out, in, 1).
    b1/b2: (H,).  Returns (B, H, L)."""
    B, H, L = x.shape

    # (out, in, 1) -> (out, in): NO transpose needed for the W @ X form.
    w1m = w1[..., 0].astype(compute_dtype)
    w2m = w2[..., 0].astype(compute_dtype)
    b1c = b1.reshape(H, 1).astype(jnp.float32)
    b2c = b2.reshape(H, 1).astype(jnp.float32)

    itemsize = jnp.dtype(x.dtype).itemsize
    if length_tile is None:
        # Keep the double-buffered (H, Lt) input + output tiles under ~20 MiB
        # so the same tiling fits v5e (16 MiB scoped default, raised below),
        # v6e (128 MiB) and v7x (64 MiB physical).  Lt must be a multiple of
        # 128 or the full L (the (8, 128) block-shape rule).
        budget = 20 * 1024 * 1024
        per_col = H * itemsize * 4            # in + out, double-buffered
        max_cols = max(128, budget // max(per_col, 1))
        length_tile = L if L <= max_cols else (max_cols // 128) * 128
    grid = (B, pl.cdiv(L, length_tile))

    # Invariant weight/bias blocks: optionally single-buffer them to buy back
    # VMEM for activation tiles (worth it for large H on v7x / v5e).  At the
    # demo H=32 the default double buffers are ~16 KiB, so leave the default.
    const_kwargs = {"pipeline_mode": pl.Buffered(1)} if single_buffer_weights else {}
    w_spec = pl.BlockSpec((H, H), lambda b, l: (0, 0), **const_kwargs)
    bias_spec = pl.BlockSpec((H, 1), lambda b, l: (0, 0), **const_kwargs)
    # B dim squeezed (None) -> kernel sees (H, Lt) blocks.
    x_spec = pl.BlockSpec((None, H, length_tile), lambda b, l: (b, 0, l))

    wbytes = jnp.dtype(compute_dtype).itemsize
    cost = pl.CostEstimate(
        flops=4 * B * L * H * H,                       # two (H,H)x(H,Lt) matmuls
        transcendentals=0,
        bytes_accessed=2 * B * H * L * itemsize + 2 * H * H * wbytes + 2 * H * 4,
    )

    kernel = functools.partial(_conv1x1_block_kernel, compute_dtype=compute_dtype)

    return pl.pallas_call(
        kernel,
        out_shape=jax.ShapeDtypeStruct((B, H, L), x.dtype),
        grid=grid,
        in_specs=[x_spec, w_spec, bias_spec, w_spec, bias_spec],
        out_specs=x_spec,
        compiler_params=pltpu.CompilerParams(
            dimension_semantics=("parallel", "parallel"),
            vmem_limit_bytes=32 * 1024 * 1024,
        ),
        cost_estimate=cost,
    )(x, w1m, b1c, w2m, b2c)


def _reference(x, w1, b1, w2, b2):
    """Pure-JAX fp32 reference mirroring the PyTorch forward (eval mode)."""
    y = jnp.einsum("oi,bil->bol", w1[..., 0], x) + b1[None, :, None]
    y = jnp.maximum(y, 0.0)
    y = jnp.einsum("oi,bil->bol", w2[..., 0], y) + b2[None, :, None]
    return y + x


if __name__ == "__main__":
    B, H, L = 2, 32, 16            # batch, hidden_dim (channels), seq length

    rng = jax.random.PRNGKey(0)
    ks = jax.random.split(rng, 5)

    x = jax.random.normal(ks[0], (B, H, L), dtype=jnp.float32)
    scale = 1.0 / (H ** 0.5)
    w1 = jax.random.normal(ks[1], (H, H, 1), dtype=jnp.float32) * scale
    w2 = jax.random.normal(ks[2], (H, H, 1), dtype=jnp.float32) * scale
    b1 = jax.random.normal(ks[3], (H,), dtype=jnp.float32) * 0.1
    b2 = jax.random.normal(ks[4], (H,), dtype=jnp.float32) * 0.1

    ref = _reference(x, w1, b1, w2, b2)

    # Default path: bf16 MXU inputs, f32 accumulation -> loose tolerance vs
    # the fp32 PyTorch-equivalent reference.
    out = jax.block_until_ready(conv_forward(x, w1, b1, w2, b2))
    assert out.shape == (B, H, L)
    assert jnp.allclose(out, ref, atol=5e-2, rtol=5e-2), "bf16 path mismatch vs reference"

    # Full-f32 path: tight tolerance sanity check of the kernel plumbing.
    out_f32 = jax.block_until_ready(
        conv_forward(x, w1, b1, w2, b2, compute_dtype=jnp.float32))
    assert jnp.allclose(out_f32, ref, atol=1e-4, rtol=1e-4), "f32 path mismatch vs reference"

    print("KERNEL_OK")
</pallas_src>

<mosaic_0001>
module attributes {stable_mosaic.version = 11 : i64} {
  func.func @_conv1x1_block_kernel(%arg0: i32, %arg1: i32, %arg2: memref<1x32x16xf32, #tpu.memory_space<vmem>>, %arg3: memref<32x32xbf16, #tpu.memory_space<vmem>>, %arg4: memref<32x1xf32, #tpu.memory_space<vmem>>, %arg5: memref<32x32xbf16, #tpu.memory_space<vmem>>, %arg6: memref<32x1xf32, #tpu.memory_space<vmem>>, %arg7: memref<1x32x16xf32, #tpu.memory_space<vmem>>) attributes {dimension_semantics = [#tpu.dimension_semantics<parallel>, #tpu.dimension_semantics<parallel>], iteration_bounds = array<i64: 2, 1>, scalar_prefetch = 0 : i64, scratch_operands = 0 : i64, tpu.core_type = #tpu.core_type<tc>, window_params = [{transform_indices = @transform_0, window_bounds = array<i64: 1, 32, 16>}, {pipeline_mode = #tpu.pipeline_mode<synchronous>, transform_indices = @transform_1, window_bounds = array<i64: 32, 32>}, {pipeline_mode = #tpu.pipeline_mode<synchronous>, transform_indices = @transform_2, window_bounds = array<i64: 32, 1>}, {pipeline_mode = #tpu.pipeline_mode<synchronous>, transform_indices = @transform_3, window_bounds = array<i64: 32, 32>}, {pipeline_mode = #tpu.pipeline_mode<synchronous>, transform_indices = @transform_4, window_bounds = array<i64: 32, 1>}, {transform_indices = @transform_5, window_bounds = array<i64: 1, 32, 16>}]} {
    %c0 = arith.constant 0 : index
    %c0_0 = arith.constant 0 : index
    %c0_1 = arith.constant 0 : index
    %0 = vector.load %arg2[%c0, %c0_0, %c0_1] : memref<1x32x16xf32, #tpu.memory_space<vmem>>, vector<1x32x16xf32>
    %1 = vector.shape_cast %0 : vector<1x32x16xf32> to vector<32x16xf32>
    %2 = arith.truncf %1 : vector<32x16xf32> to vector<32x16xbf16>
    %c0_2 = arith.constant 0 : index
    %c0_3 = arith.constant 0 : index
    %3 = vector.load %arg3[%c0_2, %c0_3] : memref<32x32xbf16, #tpu.memory_space<vmem>>, vector<32x32xbf16>
    %cst = arith.constant dense<0.000000e+00> : vector<32x16xf32>
    %4 = tpu.matmul %3, %2, %cst {dimension_numbers = #tpu.dot_dimension_numbers<[1], [0], [0], [1], [0, 0, 1, 1], [], []>} : vector<32x32xbf16>, vector<32x16xbf16>, vector<32x16xf32> -> vector<32x16xf32>
    %c0_4 = arith.constant 0 : index
    %c0_5 = arith.constant 0 : index
    %5 = vector.load %arg4[%c0_4, %c0_5] : memref<32x1xf32, #tpu.memory_space<vmem>>, vector<32x1xf32>
    %6 = vector.broadcast %5 : vector<32x1xf32> to vector<32x16xf32>
    %7 = arith.addf %4, %6 : vector<32x16xf32>
    %cst_6 = arith.constant 0.000000e+00 : f32
    %8 = vector.broadcast %cst_6 : f32 to vector<32x16xf32>
    %9 = arith.maximumf %7, %8 : vector<32x16xf32>
    %c0_7 = arith.constant 0 : index
    %c0_8 = arith.constant 0 : index
    %10 = vector.load %arg5[%c0_7, %c0_8] : memref<32x32xbf16, #tpu.memory_space<vmem>>, vector<32x32xbf16>
    %11 = arith.truncf %9 : vector<32x16xf32> to vector<32x16xbf16>
    %cst_9 = arith.constant dense<0.000000e+00> : vector<32x16xf32>
    %12 = tpu.matmul %10, %11, %cst_9 {dimension_numbers = #tpu.dot_dimension_numbers<[1], [0], [0], [1], [0, 0, 1, 1], [], []>} : vector<32x32xbf16>, vector<32x16xbf16>, vector<32x16xf32> -> vector<32x16xf32>
    %c0_10 = arith.constant 0 : index
    %c0_11 = arith.constant 0 : index
    %13 = vector.load %arg6[%c0_10, %c0_11] : memref<32x1xf32, #tpu.memory_space<vmem>>, vector<32x1xf32>
    %14 = vector.broadcast %13 : vector<32x1xf32> to vector<32x16xf32>
    %15 = arith.addf %12, %14 : vector<32x16xf32>
    %16 = arith.addf %15, %1 : vector<32x16xf32>
    %c0_12 = arith.constant 0 : index
    %c0_13 = arith.constant 0 : index
    %c0_14 = arith.constant 0 : index
    %17 = vector.load %arg7[%c0_12, %c0_13, %c0_14] : memref<1x32x16xf32, #tpu.memory_space<vmem>>, vector<1x32x16xf32>
    %18 = vector.shape_cast %17 : vector<1x32x16xf32> to vector<32x16xf32>
    %19 = vector.shape_cast %16 : vector<32x16xf32> to vector<1x32x16xf32>
    tpu.vector_store %arg7[%c0_12, %c0_13, %c0_14], %19 {strides = array<i32>} : memref<1x32x16xf32, #tpu.memory_space<vmem>>, vector<1x32x16xf32>,
    return
  }
  func.func @transform_0(%arg0: i32, %arg1: i32) -> (i32, i32, i32) {
    %c0_i32 = arith.constant 0 : i32
    %c0_i32_0 = arith.constant 0 : i32
    return %arg0, %c0_i32, %arg1 : i32, i32, i32
  }
  func.func @transform_1(%arg0: i32, %arg1: i32) -> (i32, i32) {
    %c0_i32 = arith.constant 0 : i32
    %c0_i32_0 = arith.constant 0 : i32
    %c0_i32_1 = arith.constant 0 : i32
    return %c0_i32, %c0_i32_0 : i32, i32
  }
  func.func @transform_2(%arg0: i32, %arg1: i32) -> (i32, i32) {
    %c0_i32 = arith.constant 0 : i32
    %c0_i32_0 = arith.constant 0 : i32
    %c0_i32_1 = arith.constant 0 : i32
    return %c0_i32, %c0_i32_0 : i32, i32
  }
  func.func @transform_3(%arg0: i32, %arg1: i32) -> (i32, i32) {
    %c0_i32 = arith.constant 0 : i32
    %c0_i32_0 = arith.constant 0 : i32
    %c0_i32_1 = arith.constant 0 : i32
    return %c0_i32, %c0_i32_0 : i32, i32
  }
  func.func @transform_4(%arg0: i32, %arg1: i32) -> (i32, i32) {
    %c0_i32 = arith.constant 0 : i32
    %c0_i32_0 = arith.constant 0 : i32
    %c0_i32_1 = arith.constant 0 : i32
    return %c0_i32, %c0_i32_0 : i32, i32
  }
  func.func @transform_5(%arg0: i32, %arg1: i32) -> (i32, i32, i32) {
    %c0_i32 = arith.constant 0 : i32
    %c0_i32_0 = arith.constant 0 : i32
    return %arg0, %c0_i32, %arg1 : i32, i32, i32
  }
}

</mosaic_0001>

<llo_original>
// kernel: tpu_custom_call.1
$region0: #{tpu_custom_call.1}
  #allocation0 [shape = 'u32[]', space=smem, size = 0x4, offset = 0x4, fixed_abs, tag = 'smem constant byte address 0x4 - core index']
  #allocation1 [shape = 'u32[144,128]{1,0:T(1,128)}', space=vmem, size = 0x12000, scoped, tag = 'internal scratch']
  %s0 = inlined_call_operand.vmem [shape: f32[2,32,16], index: 0, kind: input, shape index: {}]
  %s1 = inlined_call_operand.vmem [shape: bf16[32,32], index: 1, kind: input, shape index: {}]
  %s2 = inlined_call_operand.vmem [shape: f32[32,1], index: 2, kind: input, shape index: {}]
  %s3 = inlined_call_operand.vmem [shape: bf16[32,32], index: 3, kind: input, shape index: {}]
  %s4 = inlined_call_operand.vmem [shape: f32[32,1], index: 4, kind: input, shape index: {}]
  %s5 = inlined_call_operand.vmem [shape: f32[2,32,16], index: 5, kind: output, shape index: {}]
  %s6 = sld [smem:[#allocation0]]
  $region53: #{tpu_custom_call.1} parent=0
    _
  %s8 = ssub.s32 1, %s6
  %s9 = scalar_select 0, %s8, %s6
  loop: start=0, step=1, limit=4
  $region2: #{tpu_custom_call.1} parent=0 // loop_pre_header
    _
  $region3: #{tpu_custom_call.1} parent=0 // loop_header
    %s11 = sphi 0, %s15
    %p12 = scmp.ge.s32.totalorder %s11, 4
    %s18 = sphi 0, %s30
    %s19 = sphi 0, %s26
    %s20 = sphi 0, %s18
    %s21 = sphi 0, %s19
    %s22 = sphi 0, %s20
    %s23 = sphi 0, %s21
    %s35 = sphi 0, %s37
    %s38 = sphi 0, %s35
    %s39 = sphi 0, %s38
    %s55 = sphi 0, %s39
    %s59 = sphi 0, %s59
    %s61 = sphi 0, %s59
    %s62 = sphi 0, %s61
    %s76 = sphi 0, %s62
    %s80 = sphi 0, %s80
    %s82 = sphi 0, %s80
    %s83 = sphi 0, %s82
    %s97 = sphi 0, %s83
    %s101 = sphi 0, %s101
    %s103 = sphi 0, %s101
    %s104 = sphi 0, %s103
    %s118 = sphi 0, %s104
    %s122 = sphi 0, %s122
    %s124 = sphi 0, %s122
    %s125 = sphi 0, %s124
    %s139 = sphi 0, %s125
    %s147 = sphi 0, %s149
    %s150 = sphi 0, %s147
    %s151 = sphi 0, %s150
    %s167 = sphi 0, %s151
  $region4: #{tpu_custom_call.1} parent=0 // loop_header_branch
    %14 = sbr.rel (%p12) target = $region8
  $region5: #{tpu_custom_call.1} parent=0 // loop_body
    %s16 = ssub.s32 %s11, 1
    %s17 = ssub.s32 %s11, 2
    %s24 = sadd.s32 1, %s19
    %p25 = scmp.ge.s32.totalorder %s24, 1
    %s26 = scalar_select %p25, 0, %s24
    %s27 = sadd.s32 1, %s18
    %s28 = scalar_select %p25, %s27, %s18
    %p29 = scmp.ge.s32.totalorder %s28, 2
    %s30 = scalar_select %p29, 0, %s28
    %s31 = ssub.s32 %s18, %s30
    %s32 = ssub.s32 %s19, %s26
    %s33 = sor.u32 %s31, %s32
    %p34 = scmp.eq.s32.totalorder %s33, 0
    %s36 = sadd.s32 %s35, 1
    %s37 = scalar_select %p34, %s35, %s36
    %p40 = pneg %p34
    %p41 = scmp.eq.s32.totalorder %s11, 1
    %p42 = por %p40, %p41
    %p43 = scmp.ne.s32.totalorder %s35, %s38
    %p44 = scmp.eq.s32.totalorder %s11, 0
    %p45 = por %p43, %p44
    %p46 = scmp.ne.s32.totalorder %s35, %s38
    %p47 = scmp.eq.s32.totalorder %s16, 1
    %p48 = por %p46, %p47
    %p49 = scmp.ne.s32.totalorder %s38, %s39
    %p50 = scmp.eq.s32.totalorder %s16, 0
    %p51 = por %p49, %p50
    %p52 = scmp.ne.s32.totalorder %s38, %s39
    %p53 = scmp.eq.s32.totalorder %s17, 1
    %p54 = por %p52, %p53
    %p56 = scmp.ne.s32.totalorder %s39, %s55
    %p57 = scmp.eq.s32.totalorder %s17, 0
    %p58 = por %p56, %p57
    %s60 = sadd.s32 %s59, 1
    %p63 = scmp.eq.s32.totalorder %s11, 1
    %p64 = scmp.ne.s32.totalorder %s59, %s61
    %p65 = scmp.eq.s32.totalorder %s11, 0
    %p66 = por %p64, %p65
    %p67 = scmp.ne.s32.totalorder %s59, %s61
    %p68 = scmp.eq.s32.totalorder %s16, 1
    %p69 = por %p67, %p68
    %p70 = scmp.ne.s32.totalorder %s61, %s62
    %p71 = scmp.eq.s32.totalorder %s16, 0
    %p72 = por %p70, %p71
    %p73 = scmp.ne.s32.totalorder %s61, %s62
    %p74 = scmp.eq.s32.totalorder %s17, 1
    %p75 = por %p73, %p74
    %p77 = scmp.ne.s32.totalorder %s62, %s76
    %p78 = scmp.eq.s32.totalorder %s17, 0
    %p79 = por %p77, %p78
    %s81 = sadd.s32 %s80, 1
    %p84 = scmp.eq.s32.totalorder %s11, 1
    %p85 = scmp.ne.s32.totalorder %s80, %s82
    %p86 = scmp.eq.s32.totalorder %s11, 0
    %p87 = por %p85, %p86
    %p88 = scmp.ne.s32.totalorder %s80, %s82
    %p89 = scmp.eq.s32.totalorder %s16, 1
    %p90 = por %p88, %p89
    %p91 = scmp.ne.s32.totalorder %s82, %s83
    %p92 = scmp.eq.s32.totalorder %s16, 0
    %p93 = por %p91, %p92
    %p94 = scmp.ne.s32.totalorder %s82, %s83
    %p95 = scmp.eq.s32.totalorder %s17, 1
    %p96 = por %p94, %p95
    %p98 = scmp.ne.s32.totalorder %s83, %s97
    %p99 = scmp.eq.s32.totalorder %s17, 0
    %p100 = por %p98, %p99
    %s102 = sadd.s32 %s101, 1
    %p105 = scmp.eq.s32.totalorder %s11, 1
    %p106 = scmp.ne.s32.totalorder %s101, %s103
    %p107 = scmp.eq.s32.totalorder %s11, 0
    %p108 = por %p106, %p107
    %p109 = scmp.ne.s32.totalorder %s101, %s103
    %p110 = scmp.eq.s32.totalorder %s16, 1
    %p111 = por %p109, %p110
    %p112 = scmp.ne.s32.totalorder %s103, %s104
    %p113 = scmp.eq.s32.totalorder %s16, 0
    %p114 = por %p112, %p113
    %p115 = scmp.ne.s32.totalorder %s103, %s104
    %p116 = scmp.eq.s32.totalorder %s17, 1
    %p117 = por %p115, %p116
    %p119 = scmp.ne.s32.totalorder %s104, %s118
    %p120 = scmp.eq.s32.totalorder %s17, 0
    %p121 = por %p119, %p120
    %s123 = sadd.s32 %s122, 1
    %p126 = scmp.eq.s32.totalorder %s11, 1
    %p127 = scmp.ne.s32.totalorder %s122, %s124
    %p128 = scmp.eq.s32.totalorder %s11, 0
    %p129 = por %p127, %p128
    %p130 = scmp.ne.s32.totalorder %s122, %s124
    %p131 = scmp.eq.s32.totalorder %s16, 1
    %p132 = por %p130, %p131
    %p133 = scmp.ne.s32.totalorder %s124, %s125
    %p134 = scmp.eq.s32.totalorder %s16, 0
    %p135 = por %p133, %p134
    %p136 = scmp.ne.s32.totalorder %s124, %s125
    %p137 = scmp.eq.s32.totalorder %s17, 1
    %p138 = por %p136, %p137
    %p140 = scmp.ne.s32.totalorder %s125, %s139
    %p141 = scmp.eq.s32.totalorder %s17, 0
    %p142 = por %p140, %p141
    %s143 = ssub.s32 %s18, %s30
    %s144 = ssub.s32 %s19, %s26
    %s145 = sor.u32 %s143, %s144
    %p146 = scmp.eq.s32.totalorder %s145, 0
    %s148 = sadd.s32 %s147, 1
    %s149 = scalar_select %p146, %s147, %s148
    %p152 = pneg %p146
    %p153 = scmp.eq.s32.totalorder %s11, 1
    %p154 = por %p152, %p153
    %p155 = scmp.ne.s32.totalorder %s147, %s150
    %p156 = scmp.eq.s32.totalorder %s11, 0
    %p157 = por %p155, %p156
    %p158 = scmp.ne.s32.totalorder %s147, %s150
    %p159 = scmp.eq.s32.totalorder %s16, 1
    %p160 = por %p158, %p159
    %p161 = scmp.ne.s32.totalorder %s150, %s151
    %p162 = scmp.eq.s32.totalorder %s16, 0
    %p163 = por %p161, %p162
    %p164 = scmp.ne.s32.totalorder %s150, %s151
    %p165 = scmp.eq.s32.totalorder %s17, 1
    %p166 = por %p164, %p165
    %p168 = scmp.ne.s32.totalorder %s151, %s167
    %p169 = scmp.eq.s32.totalorder %s17, 0
    %p170 = por %p168, %p169
    %p171 = scmp.le.s32.totalorder 1, %s11
    %p172 = scmp.lt.s32.totalorder %s11, 3
    %p173 = pnand %p171, %p172
    %p174 = pneg %p173
    // Predicated region
    $region9: #{tpu_custom_call.1} parent=5 // pred_check
      _
    $region10: #{tpu_custom_call.1} parent=5 // pred_check_branch
      %176 = sbr.rel (%p173) target = $region12
    $region11: #{tpu_custom_call.1} parent=5 // pred_region
      %s177 = ssub.s32 %s11, 1
      // Predicated region
      $region13: #{tpu_custom_call.1} parent=11 // pred_check
        %p178 = pneg %p72
      $region14: #{tpu_custom_call.1} parent=11 // pred_check_branch
        %180 = sbr.rel (%p178) target = $region16
      $region15: #{tpu_custom_call.1} parent=11 // pred_region
        _
      $region16: #{tpu_custom_call.1} parent=11 // pred_fallthru
        _
      // Predicated region
      $region17: #{tpu_custom_call.1} parent=11 // pred_check
        %p181 = pneg %p93
      $region18: #{tpu_custom_call.1} parent=11 // pred_check_branch
        %183 = sbr.rel (%p181) target = $region20
      $region19: #{tpu_custom_call.1} parent=11 // pred_region
        _
      $region20: #{tpu_custom_call.1} parent=11 // pred_fallthru
        _
      // Predicated region
      $region21: #{tpu_custom_call.1} parent=11 // pred_check
        %p184 = pneg %p114
      $region22: #{tpu_custom_call.1} parent=11 // pred_check_branch
        %186 = sbr.rel (%p184) target = $region24
      $region23: #{tpu_custom_call.1} parent=11 // pred_region
        _
      $region24: #{tpu_custom_call.1} parent=11 // pred_fallthru
        _
      // Predicated region
      $region25: #{tpu_custom_call.1} parent=11 // pred_check
        %p187 = pneg %p135
      $region26: #{tpu_custom_call.1} parent=11 // pred_check_branch
        %189 = sbr.rel (%p187) target = $region28
      $region27: #{tpu_custom_call.1} parent=11 // pred_region
        _
      $region28: #{tpu_custom_call.1} parent=11 // pred_fallthru
        _
    $region12: #{tpu_custom_call.1} parent=5 // pred_fallthru
      _
    %p190 = scmp.lt.s32.totalorder %s11, 2
    // Predicated region
    $region29: #{tpu_custom_call.1} parent=5 // pred_check
      %p191 = pneg %p190
    $region30: #{tpu_custom_call.1} parent=5 // pred_check_branch
      %193 = sbr.rel (%p191) target = $region32
    $region31: #{tpu_custom_call.1} parent=5 // pred_region
      // Predicated region
      $region33: #{tpu_custom_call.1} parent=31 // pred_check
        %p194 = pneg %p45
      $region34: #{tpu_custom_call.1} parent=31 // pred_check_branch
        %196 = sbr.rel (%p194) target = $region36
      $region35: #{tpu_custom_call.1} parent=31 // pred_region
        %p197 = scmp.lt.s32.totalorder %s18, 1
        %s198 = scalar_select %p197, %s18, 1
        %p199 = scmp.lt.s32.totalorder %s19, 0
        %s200 = scalar_select %p199, %s19, 0
        %s201 = smul.addr %s198, 4
        %s202 = sadd.s32 %s200, %s201
        %s203 = smul.addr %s202, 8
        %s204 = scalar_lea.vmem %s0, %s203
      $region36: #{tpu_custom_call.1} parent=31 // pred_fallthru
        _
    $region32: #{tpu_custom_call.1} parent=5 // pred_fallthru
      _
    %p205 = scmp.le.s32.totalorder 1, %s11
    %p206 = scmp.lt.s32.totalorder %s11, 3
    %p207 = pnand %p205, %p206
    %p208 = pneg %p207
    // Predicated region
    $region37: #{tpu_custom_call.1} parent=5 // pred_check
      _
    $region38: #{tpu_custom_call.1} parent=5 // pred_check_branch
      %210 = sbr.rel (%p207) target = $region40
    $region39: #{tpu_custom_call.1} parent=5 // pred_region
      %s211 = ssub.s32 %s11, 1
      %p212 = scmp.lt.s32.totalorder %s20, 1
      %s213 = scalar_select %p212, %s20, 1
      %p214 = scmp.lt.s32.totalorder %s21, 0
      %s215 = scalar_select %p214, %s21, 0
      %s216 = smul.addr %s213, 4
      %s217 = sadd.s32 %s215, %s216
      %s218 = smul.addr %s217, 8
      %s219 = scalar_lea.vmem %s0, %s218
      %p220 = pneg %p51
      %p221 = pneg %p48
      %p222 = pneg %p72
      %p223 = pneg %p69
      %p224 = pneg %p93
      %p225 = pneg %p90
      %p226 = pneg %p114
      %p227 = pneg %p111
      %p228 = pneg %p135
      %p229 = pneg %p132
      %p230 = pneg %p163
      %p231 = pneg %p160
      %p232 = scmp.lt.s32.totalorder %s20, 1
      %s233 = scalar_select %p232, %s20, 1
      %p234 = scmp.lt.s32.totalorder %s21, 0
      %s235 = scalar_select %p234, %s21, 0
      %s236 = smul.addr %s233, 4
      %s237 = sadd.s32 %s235, %s236
      %s238 = smul.addr %s237, 8
      %s239 = scalar_lea.vmem %s5, %s238
      %p240 = scmp.lt.s32.totalorder %s20, 1
      %s241 = scalar_select %p240, %s20, 1
      %p242 = scmp.lt.s32.totalorder %s21, 0
      %s243 = scalar_select %p242, %s21, 0
      %s244 = smul.addr %s241, 4
      %s245 = sadd.s32 %s243, %s244
      %s246 = smul.addr %s245, 8
      %s247 = scalar_lea.vmem %s0, %s246
      %p248 = scmp.lt.s32.totalorder %s20, 1
      %s249 = scalar_select %p248, %s20, 1
      %p250 = scmp.lt.s32.totalorder %s21, 0
      %s251 = scalar_select %p250, %s21, 0
      %s252 = smul.addr %s249, 4
      %s253 = sadd.s32 %s251, %s252
      %s254 = smul.addr %s253, 8
      %s255 = scalar_lea.vmem %s5, %s254
      %v257 = vld [vmem:[%s247] sm:$0xff]
      %v258 = vld [vmem:[%s247 + $0x8] sm:$0xff]
      %v259 = vld [vmem:[%s247 + $0x10] sm:$0xff]
      %v260 = vld [vmem:[%s247 + $0x18] sm:$0xff]
      %v261 = vpack.c.bf16 %v258, %v257
      %v262 = vpack.c.bf16 %v260, %v259
      %v263 = vld [vmem:[%s1] sm:$0xf]
      %v264 = vld [vmem:[%s1 + $0x4] sm:$0xf]
      %v265 = vld [vmem:[%s1 + $0x8] sm:$0xf]
      %v266 = vld [vmem:[%s1 + $0xc] sm:$0xf]
      %v267 = vld [vmem:[%s2] sm:$0xff]
      %v268 = vld [vmem:[%s2 + $0x8] sm:$0xff]
      %v269 = vld [vmem:[%s2 + $0x10] sm:$0xff]
      %v270 = vld [vmem:[%s2 + $0x18] sm:$0xff]
      %272 = vset.pattern.permute.xlu0 0
      %273 = vperm.xlu0 %272, %v267
      %v274 = vpop.permute.xlu0 %273
      %277 = vset.pattern.permute.xlu0 0
      %278 = vperm.xlu0 %277, %v268
      %v279 = vpop.permute.xlu0 %278
      %282 = vset.pattern.permute.xlu0 0
      %283 = vperm.xlu0 %282, %v269
      %v284 = vpop.permute.xlu0 %283
      %287 = vset.pattern.permute.xlu0 0
      %288 = vperm.xlu0 %287, %v270
      %v289 = vpop.permute.xlu0 %288
      %v295 = vunpack.c.l.b16 %v263
      %v296 = vunpack.c.l.b16 %v264
      %v297 = vunpack.c.l.b16 %v265
      %v298 = vunpack.c.l.b16 %v266
      %v299 = vpack.c.b16 %v296, %v295
      %v300 = vpack.c.b16 %v298, %v297
      %vm301 = vcmask 261120
      %v303 = vsel %vm301, %v299, 0
      %v306 = vsel %vm301, %v300, 0
      %308 = vmatprep.subr.bf16.mxu0 0
      %309 = vmatpush1.bf16.msra.mxu0 0
      %310 = vmatprep.subr.bf16.mxu0 0
      %311 = vmatpush1.bf16.msra.mxu0 0
      %312 = vmatprep.subr.bf16.mxu0 0
      %313 = vmatpush1.bf16.msra.mxu0 0
      %314 = vmatprep.subr.bf16.mxu0 0
      %315 = vmatpush1.bf16.msra.mxu0 0
      %316 = vmatprep.subr.bf16.mxu0 0
      %317 = vmatpush1.bf16.msra.mxu0 0
      %318 = vmatprep.subr.bf16.mxu0 0
      %319 = vmatpush1.bf16.msra.mxu0 0
      %320 = vmatprep.subr.bf16.mxu0 0
      %321 = vmatpush1.bf16.msra.mxu0 %v262
      %322 = vmatprep.subr.bf16.mxu0 0
      %323 = vmatpush1.bf16.msra.mxu0 %v261
      %324 = vmatprep.subr.bf16.mxu0 0
      %325 = vmatpush2.bf16.msra.mxu0 0
      %326 = vmatprep.subr.bf16.mxu0 0
      %327 = vmatpush2.bf16.msra.mxu0 0
      %328 = vmatprep.subr.bf16.mxu0 0
      %329 = vmatpush2.bf16.msra.mxu0 0
      %330 = vmatprep.subr.bf16.mxu0 0
      %331 = vmatpush2.bf16.msra.mxu0 0
      %332 = vmatprep.subr.bf16.mxu0 0
      %333 = vmatpush2.bf16.msra.mxu0 0
      %334 = vmatprep.subr.bf16.mxu0 0
      %335 = vmatpush2.bf16.msra.mxu0 0
      %336 = vmatprep.subr.bf16.mxu0 0
      %337 = vmatpush2.bf16.msra.mxu0 0
      %338 = vmatprep.subr.bf16.mxu0 0
      %339 = vmatpush2.bf16.msra.mxu0 0
      %340 = vmatprep.mubr.bf16.mxu0 0
      %341 = vmatmul.mubr.bf16.gmra.mxu0 %v303
      %v342 = vpop.f32.mrf.mxu0
      %v343 = vadd.f32 %v274, %v342
      %v344 = vpop.f32.mrf.mxu0
      %v345 = vpop.f32.mrf.mxu0
      %v346 = vadd.f32 %v279, %v345
      %v347 = vpop.f32.mrf.mxu0
      %348 = vmatprep.mubr.bf16.mxu0 0
      %349 = vmatmul.mubr.bf16.gmra.mxu0 %v306
      %v350 = vpop.f32.mrf.mxu0
      %v351 = vadd.f32 %v284, %v350
      %v352 = vpop.f32.mrf.mxu0
      %v353 = vpop.f32.mrf.mxu0
      %v354 = vadd.f32 %v289, %v353
      %v355 = vpop.f32.mrf.mxu0
      %356 = vdwg.mxu0
      %v357 = vmax.f32 %v343, 0.0
      %v358 = vmax.f32 %v346, 0.0
      %v359 = vmax.f32 %v351, 0.0
      %v360 = vmax.f32 %v354, 0.0
      %v361 = vld [vmem:[%s3] sm:$0xf]
      %v362 = vld [vmem:[%s3 + $0x4] sm:$0xf]
      %v363 = vld [vmem:[%s3 + $0x8] sm:$0xf]
      %v364 = vld [vmem:[%s3 + $0xc] sm:$0xf]
      %v365 = vpack.c.bf16 %v358, %v357
      %v366 = vpack.c.bf16 %v360, %v359
      %v367 = vld [vmem:[%s4] sm:$0xff]
      %v368 = vld [vmem:[%s4 + $0x8] sm:$0xff]
      %v369 = vld [vmem:[%s4 + $0x10] sm:$0xff]
      %v370 = vld [vmem:[%s4 + $0x18] sm:$0xff]
      %372 = vset.pattern.permute.xlu0 0
      %373 = vperm.xlu0 %372, %v367
      %v374 = vpop.permute.xlu0 %373
      %377 = vset.pattern.permute.xlu0 0
      %378 = vperm.xlu0 %377, %v368
      %v379 = vpop.permute.xlu0 %378
      %382 = vset.pattern.permute.xlu0 0
      %383 = vperm.xlu0 %382, %v369
      %v384 = vpop.permute.xlu0 %383
      %387 = vset.pattern.permute.xlu0 0
      %388 = vperm.xlu0 %387, %v370
      %v389 = vpop.permute.xlu0 %388
      %v395 = vunpack.c.l.b16 %v361
      %v396 = vunpack.c.l.b16 %v362
      %v397 = vunpack.c.l.b16 %v363
      %v398 = vunpack.c.l.b16 %v364
      %v399 = vpack.c.b16 %v396, %v395
      %v400 = vpack.c.b16 %v398, %v397
      %v402 = vsel %vm301, %v399, 0
      %v405 = vsel %vm301, %v400, 0
      %407 = vmatprep.subr.bf16.mxu0 0
      %408 = vmatpush1.bf16.msra.mxu0 0
      %409 = vmatprep.subr.bf16.mxu0 0
      %410 = vmatpush1.bf16.msra.mxu0 0
      %411 = vmatprep.subr.bf16.mxu0 0
      %412 = vmatpush1.bf16.msra.mxu0 0
      %413 = vmatprep.subr.bf16.mxu0 0
      %414 = vmatpush1.bf16.msra.mxu0 0
      %415 = vmatprep.subr.bf16.mxu0 0
      %416 = vmatpush1.bf16.msra.mxu0 0
      %417 = vmatprep.subr.bf16.mxu0 0
      %418 = vmatpush1.bf16.msra.mxu0 0
      %419 = vmatprep.subr.bf16.mxu0 0
      %420 = vmatpush1.bf16.msra.mxu0 %v366
      %421 = vmatprep.subr.bf16.mxu0 0
      %422 = vmatpush1.bf16.msra.mxu0 %v365
      %423 = vmatprep.subr.bf16.mxu0 0
      %424 = vmatpush2.bf16.msra.mxu0 0
      %425 = vmatprep.subr.bf16.mxu0 0
      %426 = vmatpush2.bf16.msra.mxu0 0
      %427 = vmatprep.subr.bf16.mxu0 0
      %428 = vmatpush2.bf16.msra.mxu0 0
      %429 = vmatprep.subr.bf16.mxu0 0
      %430 = vmatpush2.bf16.msra.mxu0 0
      %431 = vmatprep.subr.bf16.mxu0 0
      %432 = vmatpush2.bf16.msra.mxu0 0
      %433 = vmatprep.subr.bf16.mxu0 0
      %434 = vmatpush2.bf16.msra.mxu0 0
      %435 = vmatprep.subr.bf16.mxu0 0
      %436 = vmatpush2.bf16.msra.mxu0 0
      %437 = vmatprep.subr.bf16.mxu0 0
      %438 = vmatpush2.bf16.msra.mxu0 0
      %439 = vmatprep.mubr.bf16.mxu0 0
      %440 = vmatmul.mubr.bf16.gmra.mxu0 %v402
      %v441 = vpop.f32.mrf.mxu0
      %v442 = vadd.f32 %v374, %v441
      %v443 = vpop.f32.mrf.mxu0
      %v444 = vpop.f32.mrf.mxu0
      %v445 = vadd.f32 %v379, %v444
      %v446 = vpop.f32.mrf.mxu0
      %447 = vmatprep.mubr.bf16.mxu0 0
      %448 = vmatmul.mubr.bf16.gmra.mxu0 %v405
      %v449 = vpop.f32.mrf.mxu0
      %v450 = vadd.f32 %v384, %v449
      %v451 = vpop.f32.mrf.mxu0
      %v452 = vpop.f32.mrf.mxu0
      %v453 = vadd.f32 %v389, %v452
      %v454 = vpop.f32.mrf.mxu0
      %455 = vdwg.mxu0
      %v456 = vadd.f32 %v442, %v257
      %v457 = vadd.f32 %v445, %v258
      %v458 = vadd.f32 %v450, %v259
      %v459 = vadd.f32 %v453, %v260
      %vm460 = vcmask 130048
      %461 = vst.msk [vmem:[%s255] sm:$0xff] %vm460, %v456
      %462 = vst.msk [vmem:[%s255 + $0x8] sm:$0xff] %vm460, %v457
      %463 = vst.msk [vmem:[%s255 + $0x10] sm:$0xff] %vm460, %v458
      %464 = vst.msk [vmem:[%s255 + $0x18] sm:$0xff] %vm460, %v459
      %p465 = scmp.lt.s32.totalorder %s20, 1
      %s466 = scalar_select %p465, %s20, 1
      %p467 = scmp.lt.s32.totalorder %s21, 0
      %s468 = scalar_select %p467, %s21, 0
      %s469 = smul.addr %s466, 4
      %s470 = sadd.s32 %s468, %s469
      %s471 = smul.addr %s470, 8
      %s472 = scalar_lea.vmem %s5, %s471
      // Predicated region
      $region41: #{tpu_custom_call.1} parent=39 // pred_check
        %p473 = pneg %p160
      $region42: #{tpu_custom_call.1} parent=39 // pred_check_branch
        %475 = sbr.rel (%p473) target = $region44
      $region43: #{tpu_custom_call.1} parent=39 // pred_region
        _
      $region44: #{tpu_custom_call.1} parent=39 // pred_fallthru
        _
    $region40: #{tpu_custom_call.1} parent=5 // pred_fallthru
      _
    %p476 = scmp.le.s32.totalorder 2, %s11
    // Predicated region
    $region45: #{tpu_custom_call.1} parent=5 // pred_check
      %p477 = pneg %p476
    $region46: #{tpu_custom_call.1} parent=5 // pred_check_branch
      %479 = sbr.rel (%p477) target = $region48
    $region47: #{tpu_custom_call.1} parent=5 // pred_region
      %s480 = ssub.s32 %s11, 2
      // Predicated region
      $region49: #{tpu_custom_call.1} parent=47 // pred_check
        %p481 = pneg %p166
      $region50: #{tpu_custom_call.1} parent=47 // pred_check_branch
        %483 = sbr.rel (%p481) target = $region52
      $region51: #{tpu_custom_call.1} parent=47 // pred_region
        %p484 = scmp.lt.s32.totalorder %s22, 1
        %s485 = scalar_select %p484, %s22, 1
        %p486 = scmp.lt.s32.totalorder %s23, 0
        %s487 = scalar_select %p486, %s23, 0
        %s488 = smul.addr %s485, 4
        %s489 = sadd.s32 %s487, %s488
        %s490 = smul.addr %s489, 8
        %s491 = scalar_lea.vmem %s5, %s490
      $region52: #{tpu_custom_call.1} parent=47 // pred_fallthru
        _
    $region48: #{tpu_custom_call.1} parent=5 // pred_fallthru
      _
  $region6: #{tpu_custom_call.1} parent=0 // loop_footer
    %s15 = sadd.s32 1, %s11
  $region7: #{tpu_custom_call.1} parent=0 // loop_footer_branch
    %10 = sbr.rel target = $region3
  $region8: #{tpu_custom_call.1} parent=0 // loop_exit
    _

</llo_original>
